<compile_context>
chip_gen: v7x
topology: tpu7x:2x2x1
jax: 0.10.0
libtpu: 0.0.40
codegen_flags: <defaults>
</compile_context>

<pallas_src>
import jax
import jax.numpy as jnp
from jax.experimental import pallas as pl
from jax.experimental.pallas import tpu as pltpu

LN_EPS = 1e-5


def clip_header_kernel(x_ref, seg_ref, w_ref, bias_ref, o_ref):
    # x_ref:    (Bb, FD)   f32, lane-dense (FD = f * n_embd = 192)
    # seg_ref:  (FD, FD)   f32, block-diagonal segment-mean matrix (resident)
    # w_ref:    (FD, OUT)  bf16, LN gamma folded in (resident)
    # bias_ref: (1, OUT)   f32, LN beta folded in
    # o_ref:    (Bb, OUT)
    x = x_ref[...].astype(jnp.float32)
    seg = seg_ref[...]

    # Per-frame LayerNorm statistics as segmented lane reductions on the MXU:
    # (x @ seg) puts each frame's mean back onto that frame's 32 lanes, so the
    # whole kernel stays lane-dense — no in-kernel reshape / XLU relayout.
    mean_b = jnp.dot(x, seg, preferred_element_type=jnp.float32)
    ex2_b = jnp.dot(x * x, seg, preferred_element_type=jnp.float32)
    var_b = ex2_b - mean_b * mean_b                      # biased var (torch LN)
    xhat = ((x - mean_b) * jax.lax.rsqrt(var_b + LN_EPS)).astype(jnp.bfloat16)

    # rearrange + Linear == ONE K = F*D contraction (affine already folded).
    acc = jnp.dot(xhat, w_ref[...], preferred_element_type=jnp.float32)
    o_ref[...] = (acc + bias_ref[...]).astype(o_ref.dtype)


def prepare_clip_header_params(ln_weight, ln_bias, fc1_weight, fc1_bias, f):
    """One-time (init-time) parameter prep. Do NOT call per forward pass.

    Folds the LayerNorm affine into fc1:
        y = (xhat*gamma + beta) @ W^T + b
          = xhat @ (gamma ⊙ W)^T + (b + beta @ W^T)
    and builds the block-diagonal segment-mean matrix used for in-kernel
    per-frame LN statistics.
    """
    out_dim, fd = fc1_weight.shape
    d = fd // f
    w_t = fc1_weight.astype(jnp.float32).T                     # (FD, OUT)
    gamma_rep = jnp.tile(ln_weight.astype(jnp.float32), f)     # (FD,)
    beta_rep = jnp.tile(ln_bias.astype(jnp.float32), f)        # (FD,)

    w_folded = (w_t * gamma_rep[:, None]).astype(jnp.bfloat16)          # gamma fold
    bias_folded = fc1_bias.astype(jnp.float32) + beta_rep @ w_t         # beta fold

    gid = jnp.arange(fd) // d
    seg_mean = ((gid[:, None] == gid[None, :]).astype(jnp.float32) / d)  # (FD, FD)

    return (w_folded,
            bias_folded.reshape(1, out_dim).astype(jnp.float32),
            seg_mean)


_BLOCK_B_CANDIDATES = (2048, 1024, 512, 256, 128, 64, 32, 16, 8)
_VMEM_BUDGET_BYTES = 20 << 20   # conservative across v5e / v6e / v7x


def _buffer_bytes(block_b, fd, out_dim):
    x_bytes = block_b * fd * 4          # f32 activations
    o_bytes = block_b * out_dim * 4     # f32 output
    w_bytes = fd * out_dim * 2          # bf16 weight (resident)
    seg_bytes = fd * fd * 4             # f32 segment-mean matrix (resident)
    bias_bytes = out_dim * 4
    # double-buffered by the Pallas pipeline
    return 2 * (x_bytes + o_bytes + w_bytes + seg_bytes + bias_bytes)


def _pick_block_b(b, fd, out_dim):
    # Aim for >=2 grid steps once B is non-trivial: shards across the two
    # TensorCores on v7x and enables DMA/compute pipelining; neutral on
    # single-TC v5e/v6e (one extra ~0.35us grid step).
    target = max(8, b // 2) if b >= 16 else max(8, b)
    for cand in _BLOCK_B_CANDIDATES:
        if cand <= target and _buffer_bytes(cand, fd, out_dim) <= _VMEM_BUDGET_BYTES:
            return cand
    return 8


def clip_header_forward(x, w_fd_out, bias_row, seg_mean, b, f, out_dtype=None):
    """x: (b*f, 1, d) f32. Prepped params from prepare_clip_header_params.

    Returns (b, 512) in out_dtype (default: x.dtype, i.e. f32 like the module).
    """
    bf_, one, d = x.shape
    assert bf_ == b * f and one == 1
    fd, out_dim = w_fd_out.shape
    assert fd == f * d and seg_mean.shape == (fd, fd)
    out_dtype = x.dtype if out_dtype is None else out_dtype

    # '(b f) 1 d -> b (f d)' is a contiguous reshape — free layout plumbing.
    x_2d = x.reshape(b, fd)

    block_b = _pick_block_b(b, fd, out_dim)
    b_pad = pl.cdiv(b, block_b) * block_b
    if b_pad != b:
        # Padding (instead of a giant fallback block) keeps tiles bounded and
        # pipelined for awkward B; zero rows are harmless and sliced off.
        x_2d = jnp.pad(x_2d, ((0, b_pad - b), (0, 0)))
    grid = (b_pad // block_b,)

    needed = _buffer_bytes(block_b, fd, out_dim)
    vmem_limit = int(min(64 << 20, max(2 * needed, 32 << 20)))

    out = pl.pallas_call(
        clip_header_kernel,
        out_shape=jax.ShapeDtypeStruct((b_pad, out_dim), out_dtype),
        grid=grid,
        in_specs=[
            pl.BlockSpec((block_b, fd), lambda i: (i, 0)),
            pl.BlockSpec((fd, fd), lambda i: (0, 0)),        # resident
            pl.BlockSpec((fd, out_dim), lambda i: (0, 0)),   # resident
            pl.BlockSpec((1, out_dim), lambda i: (0, 0)),
        ],
        out_specs=pl.BlockSpec((block_b, out_dim), lambda i: (i, 0)),
        compiler_params=pltpu.CompilerParams(
            dimension_semantics=("parallel",),               # megacore / dual-TC
            vmem_limit_bytes=vmem_limit),
    )(x_2d, seg_mean, w_fd_out, bias_row)

    return out[:b] if b_pad != b else out


def reference_forward(x, ln_weight, ln_bias, fc1_weight, fc1_bias, b, f):
    xf = x.astype(jnp.float32)
    mean = jnp.mean(xf, axis=-1, keepdims=True)
    var = jnp.mean((xf - mean) ** 2, axis=-1, keepdims=True)
    ln = (xf - mean) / jnp.sqrt(var + LN_EPS) * ln_weight + ln_bias
    flat = ln.reshape(b, f * x.shape[-1])
    return flat @ fc1_weight.T + fc1_bias


if __name__ == "__main__":
    b, f, n_embd, out_dim = 2, 6, 32, 512

    key = jax.random.PRNGKey(0)
    kx, kw, kb, kg, kbe = jax.random.split(key, 5)

    x = jax.random.normal(kx, (b * f, 1, n_embd), dtype=jnp.float32)

    # Deterministic synthetic parameters (shapes from the module's __init__).
    ln_weight = jnp.ones((n_embd,), jnp.float32) + 0.1 * jax.random.normal(kg, (n_embd,))
    ln_bias = 0.1 * jax.random.normal(kbe, (n_embd,))
    fc1_weight = 0.02 * jax.random.normal(kw, (out_dim, n_embd * 6), dtype=jnp.float32)
    fc1_bias = 0.02 * jax.random.normal(kb, (out_dim,), dtype=jnp.float32)

    # One-time parameter prep (hoisted out of the per-call path).
    w_fd_out, bias_row, seg_mean = prepare_clip_header_params(
        ln_weight, ln_bias, fc1_weight, fc1_bias, f)
    w_fd_out = jax.block_until_ready(w_fd_out)
    bias_row = jax.block_until_ready(bias_row)
    seg_mean = jax.block_until_ready(seg_mean)

    out = clip_header_forward(x, w_fd_out, bias_row, seg_mean, b, f)
    out = jax.block_until_ready(out)

    ref = reference_forward(x, ln_weight, ln_bias, fc1_weight, fc1_bias, b, f)
    assert out.shape == (b, out_dim)
    # bf16 weight + bf16 xhat feed the MXU -> tolerance loosened vs the f32 ref.
    assert jnp.allclose(out, ref, atol=2e-2, rtol=2e-2), "mismatch vs reference"

    print("KERNEL_OK")
</pallas_src>

<mosaic_0001>
module attributes {stable_mosaic.version = 11 : i64} {
  func.func @clip_header_kernel(%arg0: i32, %arg1: memref<8x192xf32, #tpu.memory_space<vmem>>, %arg2: memref<192x192xf32, #tpu.memory_space<vmem>>, %arg3: memref<192x512xbf16, #tpu.memory_space<vmem>>, %arg4: memref<1x512xf32, #tpu.memory_space<vmem>>, %arg5: memref<8x512xf32, #tpu.memory_space<vmem>>) attributes {dimension_semantics = [#tpu.dimension_semantics<parallel>], iteration_bounds = array<i64: 1>, scalar_prefetch = 0 : i64, scratch_operands = 0 : i64, tpu.core_type = #tpu.core_type<tc>, window_params = [{transform_indices = @transform_0, window_bounds = array<i64: 8, 192>}, {pipeline_mode = #tpu.pipeline_mode<synchronous>, transform_indices = @transform_1, window_bounds = array<i64: 192, 192>}, {pipeline_mode = #tpu.pipeline_mode<synchronous>, transform_indices = @transform_2, window_bounds = array<i64: 192, 512>}, {pipeline_mode = #tpu.pipeline_mode<synchronous>, transform_indices = @transform_3, window_bounds = array<i64: 1, 512>}, {transform_indices = @transform_4, window_bounds = array<i64: 8, 512>}]} {
    %c0 = arith.constant 0 : index
    %c0_0 = arith.constant 0 : index
    %0 = vector.load %arg1[%c0, %c0_0] : memref<8x192xf32, #tpu.memory_space<vmem>>, vector<8x192xf32>
    %c0_1 = arith.constant 0 : index
    %c0_2 = arith.constant 0 : index
    %1 = vector.load %arg2[%c0_1, %c0_2] : memref<192x192xf32, #tpu.memory_space<vmem>>, vector<192x192xf32>
    %cst = arith.constant dense<0.000000e+00> : vector<8x192xf32>
    %2 = tpu.matmul %0, %1, %cst {dimension_numbers = #tpu.dot_dimension_numbers<[1], [0], [0], [1], [0, 0, 1, 1], [], []>} : vector<8x192xf32>, vector<192x192xf32>, vector<8x192xf32> -> vector<8x192xf32>
    %3 = arith.mulf %0, %0 : vector<8x192xf32>
    %cst_3 = arith.constant dense<0.000000e+00> : vector<8x192xf32>
    %4 = tpu.matmul %3, %1, %cst_3 {dimension_numbers = #tpu.dot_dimension_numbers<[1], [0], [0], [1], [0, 0, 1, 1], [], []>} : vector<8x192xf32>, vector<192x192xf32>, vector<8x192xf32> -> vector<8x192xf32>
    %5 = arith.mulf %2, %2 : vector<8x192xf32>
    %6 = arith.subf %4, %5 : vector<8x192xf32>
    %7 = arith.subf %0, %2 : vector<8x192xf32>
    %cst_4 = arith.constant 9.99999974E-6 : f32
    %8 = vector.broadcast %cst_4 : f32 to vector<8x192xf32>
    %9 = arith.addf %6, %8 : vector<8x192xf32>
    %10 = math.rsqrt %9 : vector<8x192xf32>
    %11 = arith.mulf %7, %10 : vector<8x192xf32>
    %12 = arith.truncf %11 : vector<8x192xf32> to vector<8x192xbf16>
    %c0_5 = arith.constant 0 : index
    %c0_6 = arith.constant 0 : index
    %13 = vector.load %arg3[%c0_5, %c0_6] : memref<192x512xbf16, #tpu.memory_space<vmem>>, vector<192x512xbf16>
    %cst_7 = arith.constant dense<0.000000e+00> : vector<8x512xf32>
    %14 = tpu.matmul %12, %13, %cst_7 {dimension_numbers = #tpu.dot_dimension_numbers<[1], [0], [0], [1], [0, 0, 1, 1], [], []>} : vector<8x192xbf16>, vector<192x512xbf16>, vector<8x512xf32> -> vector<8x512xf32>
    %c0_8 = arith.constant 0 : index
    %c0_9 = arith.constant 0 : index
    %15 = vector.load %arg4[%c0_8, %c0_9] : memref<1x512xf32, #tpu.memory_space<vmem>>, vector<1x512xf32>
    %16 = vector.broadcast %15 : vector<1x512xf32> to vector<8x512xf32>
    %17 = arith.addf %14, %16 : vector<8x512xf32>
    %c0_10 = arith.constant 0 : index
    %c0_11 = arith.constant 0 : index
    %18 = vector.load %arg5[%c0_10, %c0_11] : memref<8x512xf32, #tpu.memory_space<vmem>>, vector<8x512xf32>
    tpu.vector_store %arg5[%c0_10, %c0_11], %17 {strides = array<i32>} : memref<8x512xf32, #tpu.memory_space<vmem>>, vector<8x512xf32>,
    return
  }
  func.func @transform_0(%arg0: i32) -> (i32, i32) {
    %c0_i32 = arith.constant 0 : i32
    %c0_i32_0 = arith.constant 0 : i32
    return %arg0, %c0_i32 : i32, i32
  }
  func.func @transform_1(%arg0: i32) -> (i32, i32) {
    %c0_i32 = arith.constant 0 : i32
    %c0_i32_0 = arith.constant 0 : i32
    %c0_i32_1 = arith.constant 0 : i32
    return %c0_i32, %c0_i32_0 : i32, i32
  }
  func.func @transform_2(%arg0: i32) -> (i32, i32) {
    %c0_i32 = arith.constant 0 : i32
    %c0_i32_0 = arith.constant 0 : i32
    %c0_i32_1 = arith.constant 0 : i32
    return %c0_i32, %c0_i32_0 : i32, i32
  }
  func.func @transform_3(%arg0: i32) -> (i32, i32) {
    %c0_i32 = arith.constant 0 : i32
    %c0_i32_0 = arith.constant 0 : i32
    %c0_i32_1 = arith.constant 0 : i32
    return %c0_i32, %c0_i32_0 : i32, i32
  }
  func.func @transform_4(%arg0: i32) -> (i32, i32) {
    %c0_i32 = arith.constant 0 : i32
    %c0_i32_0 = arith.constant 0 : i32
    return %arg0, %c0_i32 : i32, i32
  }
}

</mosaic_0001>

<llo_original>
// kernel: tpu_custom_call.1
$region0: #{tpu_custom_call.1}
  #allocation0 [shape = 'u32[]', space=smem, size = 0x4, offset = 0x4, fixed_abs, tag = 'smem constant byte address 0x4 - core index']
  #allocation1 [shape = 'u32[144,128]{1,0:T(1,128)}', space=vmem, size = 0x12000, scoped, tag = 'internal scratch']
  %s0 = inlined_call_operand.hbm [shape: f32[8,192], index: 0, kind: input, shape index: {}]
  %s1 = inlined_call_operand.hbm [shape: f32[192,192], index: 1, kind: input, shape index: {}]
  %s2 = inlined_call_operand.hbm [shape: bf16[192,512], index: 2, kind: input, shape index: {}]
  %s3 = inlined_call_operand.vmem [shape: f32[1,512], index: 3, kind: input, shape index: {}]
  %s4 = inlined_call_operand.hbm [shape: f32[8,512], index: 4, kind: output, shape index: {}]
  %s5 = sld [smem:[#allocation0]]
  $region38: #{tpu_custom_call.1} parent=0
    _
  %s7 = ssub.s32 1, %s5
  %s8 = scalar_select 0, %s7, %s5
  $region1: #{tpu_custom_call.1} parent=0
    #allocation2 [shape = 'u8[8192]{0}', space=vmem, size = 0x2000, scoped, tag = 'input window, operand 0, single buffered']
    #allocation3 [shape = 's32[1]{0}', space=sflag, size = 0x4, scoped, tag = 'scoped memory for tpu_custom_call.1']
    #allocation4 [shape = 's32[1]{0}', space=sflag, size = 0x4, scoped, tag = 'scoped memory for tpu_custom_call.1']
    #allocation5 [shape = 'u8[196608]{0}', space=vmem, size = 0x30000, scoped, tag = 'input window, operand 1, single buffered']
    #allocation6 [shape = 's32[1]{0}', space=sflag, size = 0x4, scoped, tag = 'scoped memory for tpu_custom_call.1']
    #allocation7 [shape = 'u8[196608]{0}', space=vmem, size = 0x30000, scoped, tag = 'input window, operand 2, single buffered']
    #allocation8 [shape = 'u8[16384]{0}', space=vmem, size = 0x4000, scoped, tag = 'output window, operand 0, single buffered']
    %9 = vsyncpa [#allocation3], 0
    %10 = vsyncpa [#allocation6], 0
    %11 = vsyncpa [#allocation4], 0
    // Predicated region
    $region2: #{tpu_custom_call.1} parent=1 // pred_check
      _
    $region3: #{tpu_custom_call.1} parent=1 // pred_check_branch
      %13 = sbr.rel (0) target = $region5
    $region4: #{tpu_custom_call.1} parent=1 // pred_region
      %s15 = ssub.s32 256, 256
      %16 = vsyncadd [#allocation3], %s15
      %s18 = sshll.u32 [#allocation2], 4
      %s19 = int_to_ptr.vmem [resolvable:$true] %s18
      %21 = dma.hbm_to_vmem [thread:$0]  %s0, 256, %s19, [#allocation3]
    $region5: #{tpu_custom_call.1} parent=1 // pred_fallthru
      _
    // Predicated region
    $region6: #{tpu_custom_call.1} parent=1 // pred_check
      _
    $region7: #{tpu_custom_call.1} parent=1 // pred_check_branch
      %23 = sbr.rel (0) target = $region9
    $region8: #{tpu_custom_call.1} parent=1 // pred_region
      %s25 = ssub.s32 6144, 6144
      %26 = vsyncadd [#allocation6], %s25
      %s27 = sshll.u32 [#allocation5], 4
      %s28 = int_to_ptr.vmem [resolvable:$true] %s27
      %33 = dma.hbm_to_vmem [thread:$0]  %s1, 6144, %s28, [#allocation6], 256, 256, 16
    $region9: #{tpu_custom_call.1} parent=1 // pred_fallthru
      _
    // Predicated region
    $region10: #{tpu_custom_call.1} parent=1 // pred_check
      _
    $region11: #{tpu_custom_call.1} parent=1 // pred_check_branch
      %35 = sbr.rel (0) target = $region13
    $region12: #{tpu_custom_call.1} parent=1 // pred_region
      %s37 = ssub.s32 6144, 6144
      %38 = vsyncadd [#allocation6], %s37
      %s39 = sshll.u32 [#allocation7], 4
      %s40 = int_to_ptr.vmem [resolvable:$true] %s39
      %45 = dma.hbm_to_vmem [thread:$0]  %s2, 6144, %s40, [#allocation6], 256, 256, 16
    $region13: #{tpu_custom_call.1} parent=1 // pred_fallthru
      _
    // Predicated region
    $region14: #{tpu_custom_call.1} parent=1 // pred_check
      _
    $region15: #{tpu_custom_call.1} parent=1 // pred_check_branch
      %47 = sbr.rel (0) target = $region17
    $region16: #{tpu_custom_call.1} parent=1 // pred_region
      _
    $region17: #{tpu_custom_call.1} parent=1 // pred_fallthru
      _
    // Predicated region
    $region18: #{tpu_custom_call.1} parent=1 // pred_check
      _
    $region19: #{tpu_custom_call.1} parent=1 // pred_check_branch
      %49 = sbr.rel (0) target = $region21
    $region20: #{tpu_custom_call.1} parent=1 // pred_region
      %50 = dma.done [#allocation3], 256
    $region21: #{tpu_custom_call.1} parent=1 // pred_fallthru
      _
    // Predicated region
    $region22: #{tpu_custom_call.1} parent=1 // pred_check
      _
    $region23: #{tpu_custom_call.1} parent=1 // pred_check_branch
      %52 = sbr.rel (0) target = $region25
    $region24: #{tpu_custom_call.1} parent=1 // pred_region
      %53 = dma.done [#allocation6], 6144
    $region25: #{tpu_custom_call.1} parent=1 // pred_fallthru
      _
    // Predicated region
    $region26: #{tpu_custom_call.1} parent=1 // pred_check
      _
    $region27: #{tpu_custom_call.1} parent=1 // pred_check_branch
      %55 = sbr.rel (0) target = $region29
    $region28: #{tpu_custom_call.1} parent=1 // pred_region
      %56 = dma.done [#allocation6], 6144
    $region29: #{tpu_custom_call.1} parent=1 // pred_fallthru
      _
    %v58 = vld [vmem:[#allocation2] sm:$0xff]
    %v59 = vld [vmem:[#allocation2 + $0x8] sm:$0xff]
    %v60 = vld [vmem:[#allocation5] sm:$0xff]
    %v61 = vld [vmem:[#allocation5 + $0x8] sm:$0xff]
    %v62 = vld [vmem:[#allocation5 + $0x10] sm:$0xff]
    %v63 = vld [vmem:[#allocation5 + $0x18] sm:$0xff]
    %v64 = vld [vmem:[#allocation5 + $0x20] sm:$0xff]
    %v65 = vld [vmem:[#allocation5 + $0x28] sm:$0xff]
    %v66 = vld [vmem:[#allocation5 + $0x30] sm:$0xff]
    %v67 = vld [vmem:[#allocation5 + $0x38] sm:$0xff]
    %v68 = vld [vmem:[#allocation5 + $0x40] sm:$0xff]
    %v69 = vld [vmem:[#allocation5 + $0x48] sm:$0xff]
    %v70 = vld [vmem:[#allocation5 + $0x50] sm:$0xff]
    %v71 = vld [vmem:[#allocation5 + $0x58] sm:$0xff]
    %v72 = vld [vmem:[#allocation5 + $0x60] sm:$0xff]
    %v73 = vld [vmem:[#allocation5 + $0x68] sm:$0xff]
    %v74 = vld [vmem:[#allocation5 + $0x70] sm:$0xff]
    %v75 = vld [vmem:[#allocation5 + $0x78] sm:$0xff]
    %v76 = vld [vmem:[#allocation5 + $0x80] sm:$0xff]
    %v77 = vld [vmem:[#allocation5 + $0x88] sm:$0xff]
    %v78 = vld [vmem:[#allocation5 + $0x90] sm:$0xff]
    %v79 = vld [vmem:[#allocation5 + $0x98] sm:$0xff]
    %v80 = vld [vmem:[#allocation5 + $0xa0] sm:$0xff]
    %v81 = vld [vmem:[#allocation5 + $0xa8] sm:$0xff]
    %v82 = vld [vmem:[#allocation5 + $0xb0] sm:$0xff]
    %v83 = vld [vmem:[#allocation5 + $0xb8] sm:$0xff]
    %v84 = vld [vmem:[#allocation5 + $0xc0] sm:$0xff]
    %v85 = vld [vmem:[#allocation5 + $0xc8] sm:$0xff]
    %v86 = vld [vmem:[#allocation5 + $0xd0] sm:$0xff]
    %v87 = vld [vmem:[#allocation5 + $0xd8] sm:$0xff]
    %v88 = vld [vmem:[#allocation5 + $0xe0] sm:$0xff]
    %v89 = vld [vmem:[#allocation5 + $0xe8] sm:$0xff]
    %v90 = vld [vmem:[#allocation5 + $0xf0] sm:$0xff]
    %v91 = vld [vmem:[#allocation5 + $0xf8] sm:$0xff]
    %v92 = vld [vmem:[#allocation5 + $0x100] sm:$0xff]
    %v93 = vld [vmem:[#allocation5 + $0x108] sm:$0xff]
    %v94 = vld [vmem:[#allocation5 + $0x110] sm:$0xff]
    %v95 = vld [vmem:[#allocation5 + $0x118] sm:$0xff]
    %v96 = vld [vmem:[#allocation5 + $0x120] sm:$0xff]
    %v97 = vld [vmem:[#allocation5 + $0x128] sm:$0xff]
    %v98 = vld [vmem:[#allocation5 + $0x130] sm:$0xff]
    %v99 = vld [vmem:[#allocation5 + $0x138] sm:$0xff]
    %v100 = vld [vmem:[#allocation5 + $0x140] sm:$0xff]
    %v101 = vld [vmem:[#allocation5 + $0x148] sm:$0xff]
    %v102 = vld [vmem:[#allocation5 + $0x150] sm:$0xff]
    %v103 = vld [vmem:[#allocation5 + $0x158] sm:$0xff]
    %v104 = vld [vmem:[#allocation5 + $0x160] sm:$0xff]
    %v105 = vld [vmem:[#allocation5 + $0x168] sm:$0xff]
    %v106 = vld [vmem:[#allocation5 + $0x170] sm:$0xff]
    %v107 = vld [vmem:[#allocation5 + $0x178] sm:$0xff]
    %vm108 = vcmask 523264
    %v110 = vsel %vm108, %v59, 0
    %112 = vmatprep.subr.mxu0 %v61
    %113 = vmatpush1.msra.mxu0 %v60
    %114 = vmatprep.subr.mxu0 %v63
    %115 = vmatpush1.msra.mxu0 %v62
    %116 = vmatprep.subr.mxu0 %v65
    %117 = vmatpush1.msra.mxu0 %v64
    %118 = vmatprep.subr.mxu0 %v67
    %119 = vmatpush1.msra.mxu0 %v66
    %120 = vmatprep.subr.mxu0 %v69
    %121 = vmatpush1.msra.mxu0 %v68
    %122 = vmatprep.subr.mxu0 %v71
    %123 = vmatpush1.msra.mxu0 %v70
    %124 = vmatprep.subr.mxu0 %v73
    %125 = vmatpush1.msra.mxu0 %v72
    %126 = vmatprep.subr.mxu0 %v75
    %127 = vmatpush1.msra.mxu0 %v74
    %128 = vmatprep.subr.mxu0 %v77
    %129 = vmatpush1.msra.mxu0 %v76
    %130 = vmatprep.subr.mxu0 %v79
    %131 = vmatpush1.msra.mxu0 %v78
    %132 = vmatprep.subr.mxu0 %v81
    %133 = vmatpush1.msra.mxu0 %v80
    %134 = vmatprep.subr.mxu0 %v83
    %135 = vmatpush1.msra.mxu0 %v82
    %136 = vmatprep.subr.mxu0 %v85
    %137 = vmatpush1.msra.mxu0 %v84
    %138 = vmatprep.subr.mxu0 %v87
    %139 = vmatpush1.msra.mxu0 %v86
    %140 = vmatprep.subr.mxu0 %v89
    %141 = vmatpush1.msra.mxu0 %v88
    %142 = vmatprep.subr.mxu0 %v91
    %143 = vmatpush1.msra.mxu0 %v90
    %144 = vmatprep.subr.mxu0 %v93
    %145 = vmatpush1.msra.mxu0 %v92
    %146 = vmatprep.subr.mxu0 %v95
    %147 = vmatpush1.msra.mxu0 %v94
    %148 = vmatprep.subr.mxu0 %v97
    %149 = vmatpush1.msra.mxu0 %v96
    %150 = vmatprep.subr.mxu0 %v99
    %151 = vmatpush1.msra.mxu0 %v98
    %152 = vmatprep.subr.mxu0 %v101
    %153 = vmatpush1.msra.mxu0 %v100
    %154 = vmatprep.subr.mxu0 %v103
    %155 = vmatpush1.msra.mxu0 %v102
    %156 = vmatprep.subr.mxu0 %v105
    %157 = vmatpush1.msra.mxu0 %v104
    %158 = vmatprep.subr.mxu0 %v107
    %159 = vmatpush1.msra.mxu0 %v106
    %160 = vmatprep.subr.mxu0 0.0
    %161 = vmatpush1.msra.mxu0 0.0
    %162 = vmatprep.subr.mxu0 0.0
    %163 = vmatpush1.msra.mxu0 0.0
    %164 = vmatprep.subr.mxu0 0.0
    %165 = vmatpush1.msra.mxu0 0.0
    %166 = vmatprep.subr.mxu0 0.0
    %167 = vmatpush1.msra.mxu0 0.0
    %168 = vmatprep.subr.mxu0 0.0
    %169 = vmatpush1.msra.mxu0 0.0
    %170 = vmatprep.subr.mxu0 0.0
    %171 = vmatpush1.msra.mxu0 0.0
    %172 = vmatprep.subr.mxu0 0.0
    %173 = vmatpush1.msra.mxu0 0.0
    %174 = vmatprep.subr.mxu0 0.0
    %175 = vmatpush1.msra.mxu0 0.0
    %176 = vmatprep.mubr.f32.mxu0 %v110
    %177 = vmatmul.mubr.f32.gmra.mrb[0].mxu0 %v58
    %v178 = vpop.f32.mrb[0].mxu0
    %v179 = vadd.f32 0.0, %v178
    %v180 = vpop.f32.mrb[0].mxu0
    %v181 = vadd.f32 0.0, %v180
    %182 = vdwg.mxu0
    %v183 = vmul.f32 %v58, %v58
    %v184 = vmul.f32 %v59, %v59
    %v186 = vsel %vm108, %v184, 0
    %188 = vmatprep.subr.mxu0 %v61
    %189 = vmatpush1.msra.mxu0 %v60
    %190 = vmatprep.subr.mxu0 %v63
    %191 = vmatpush1.msra.mxu0 %v62
    %192 = vmatprep.subr.mxu0 %v65
    %193 = vmatpush1.msra.mxu0 %v64
    %194 = vmatprep.subr.mxu0 %v67
    %195 = vmatpush1.msra.mxu0 %v66
    %196 = vmatprep.subr.mxu0 %v69
    %197 = vmatpush1.msra.mxu0 %v68
    %198 = vmatprep.subr.mxu0 %v71
    %199 = vmatpush1.msra.mxu0 %v70
    %200 = vmatprep.subr.mxu0 %v73
    %201 = vmatpush1.msra.mxu0 %v72
    %202 = vmatprep.subr.mxu0 %v75
    %203 = vmatpush1.msra.mxu0 %v74
    %204 = vmatprep.subr.mxu0 %v77
    %205 = vmatpush1.msra.mxu0 %v76
    %206 = vmatprep.subr.mxu0 %v79
    %207 = vmatpush1.msra.mxu0 %v78
    %208 = vmatprep.subr.mxu0 %v81
    %209 = vmatpush1.msra.mxu0 %v80
    %210 = vmatprep.subr.mxu0 %v83
    %211 = vmatpush1.msra.mxu0 %v82
    %212 = vmatprep.subr.mxu0 %v85
    %213 = vmatpush1.msra.mxu0 %v84
    %214 = vmatprep.subr.mxu0 %v87
    %215 = vmatpush1.msra.mxu0 %v86
    %216 = vmatprep.subr.mxu0 %v89
    %217 = vmatpush1.msra.mxu0 %v88
    %218 = vmatprep.subr.mxu0 %v91
    %219 = vmatpush1.msra.mxu0 %v90
    %220 = vmatprep.subr.mxu0 %v93
    %221 = vmatpush1.msra.mxu0 %v92
    %222 = vmatprep.subr.mxu0 %v95
    %223 = vmatpush1.msra.mxu0 %v94
    %224 = vmatprep.subr.mxu0 %v97
    %225 = vmatpush1.msra.mxu0 %v96
    %226 = vmatprep.subr.mxu0 %v99
    %227 = vmatpush1.msra.mxu0 %v98
    %228 = vmatprep.subr.mxu0 %v101
    %229 = vmatpush1.msra.mxu0 %v100
    %230 = vmatprep.subr.mxu0 %v103
    %231 = vmatpush1.msra.mxu0 %v102
    %232 = vmatprep.subr.mxu0 %v105
    %233 = vmatpush1.msra.mxu0 %v104
    %234 = vmatprep.subr.mxu0 %v107
    %235 = vmatpush1.msra.mxu0 %v106
    %236 = vmatprep.subr.mxu0 0.0
    %237 = vmatpush1.msra.mxu0 0.0
    %238 = vmatprep.subr.mxu0 0.0
    %239 = vmatpush1.msra.mxu0 0.0
    %240 = vmatprep.subr.mxu0 0.0
    %241 = vmatpush1.msra.mxu0 0.0
    %242 = vmatprep.subr.mxu0 0.0
    %243 = vmatpush1.msra.mxu0 0.0
    %244 = vmatprep.subr.mxu0 0.0
    %245 = vmatpush1.msra.mxu0 0.0
    %246 = vmatprep.subr.mxu0 0.0
    %247 = vmatpush1.msra.mxu0 0.0
    %248 = vmatprep.subr.mxu0 0.0
    %249 = vmatpush1.msra.mxu0 0.0
    %250 = vmatprep.subr.mxu0 0.0
    %251 = vmatpush1.msra.mxu0 0.0
    %252 = vmatprep.mubr.f32.mxu0 %v186
    %253 = vmatmul.mubr.f32.gmra.mrb[0].mxu0 %v183
    %v254 = vpop.f32.mrb[0].mxu0
    %v255 = vadd.f32 0.0, %v254
    %v256 = vpop.f32.mrb[0].mxu0
    %v257 = vadd.f32 0.0, %v256
    %258 = vdwg.mxu0
    %v259 = vmul.f32 %v179, %v179
    %v260 = vmul.f32 %v181, %v181
    %v261 = vsub.f32 %v255, %v259
    %v262 = vsub.f32 %v257, %v260
    %v263 = vsub.f32 %v58, %v179
    %v264 = vsub.f32 %v59, %v181
    %v265 = vadd.f32 %v261, 1e-05
    %v266 = vadd.f32 %v262, 1e-05
    %v267 = vrsqrt.pop %v265
    %v268 = vrsqrt.pop %v266
    %v269 = vmul.f32 %v263, %v267
    %v270 = vmul.f32 %v264, %v268
    %v271 = vpack.c.bf16 %v269, %v269
    %v272 = vpack.c.bf16 %v270, %v270
    %v273 = vld [vmem:[#allocation7] sm:$0xff]
    %v274 = vld [vmem:[#allocation7 + $0x8] sm:$0xff]
    %v275 = vld [vmem:[#allocation7 + $0x10] sm:$0xff]
    %v276 = vld [vmem:[#allocation7 + $0x18] sm:$0xff]
    %v277 = vld [vmem:[#allocation7 + $0x20] sm:$0xff]
    %v278 = vld [vmem:[#allocation7 + $0x28] sm:$0xff]
    %v279 = vld [vmem:[#allocation7 + $0x30] sm:$0xff]
    %v280 = vld [vmem:[#allocation7 + $0x38] sm:$0xff]
    %v281 = vld [vmem:[#allocation7 + $0x40] sm:$0xff]
    %v282 = vld [vmem:[#allocation7 + $0x48] sm:$0xff]
    %v283 = vld [vmem:[#allocation7 + $0x50] sm:$0xff]
    %v284 = vld [vmem:[#allocation7 + $0x58] sm:$0xff]
    %v285 = vld [vmem:[#allocation7 + $0x60] sm:$0xff]
    %v286 = vld [vmem:[#allocation7 + $0x68] sm:$0xff]
    %v287 = vld [vmem:[#allocation7 + $0x70] sm:$0xff]
    %v288 = vld [vmem:[#allocation7 + $0x78] sm:$0xff]
    %v289 = vld [vmem:[#allocation7 + $0x80] sm:$0xff]
    %v290 = vld [vmem:[#allocation7 + $0x88] sm:$0xff]
    %v291 = vld [vmem:[#allocation7 + $0x90] sm:$0xff]
    %v292 = vld [vmem:[#allocation7 + $0x98] sm:$0xff]
    %v293 = vld [vmem:[#allocation7 + $0xa0] sm:$0xff]
    %v294 = vld [vmem:[#allocation7 + $0xa8] sm:$0xff]
    %v295 = vld [vmem:[#allocation7 + $0xb0] sm:$0xff]
    %v296 = vld [vmem:[#allocation7 + $0xb8] sm:$0xff]
    %v297 = vld [vmem:[#allocation7 + $0xc0] sm:$0xff]
    %v298 = vld [vmem:[#allocation7 + $0xc8] sm:$0xff]
    %v299 = vld [vmem:[#allocation7 + $0xd0] sm:$0xff]
    %v300 = vld [vmem:[#allocation7 + $0xd8] sm:$0xff]
    %v301 = vld [vmem:[#allocation7 + $0xe0] sm:$0xff]
    %v302 = vld [vmem:[#allocation7 + $0xe8] sm:$0xff]
    %v303 = vld [vmem:[#allocation7 + $0xf0] sm:$0xff]
    %v304 = vld [vmem:[#allocation7 + $0xf8] sm:$0xff]
    %v305 = vld [vmem:[#allocation7 + $0x100] sm:$0xff]
    %v306 = vld [vmem:[#allocation7 + $0x108] sm:$0xff]
    %v307 = vld [vmem:[#allocation7 + $0x110] sm:$0xff]
    %v308 = vld [vmem:[#allocation7 + $0x118] sm:$0xff]
    %v309 = vld [vmem:[#allocation7 + $0x120] sm:$0xff]
    %v310 = vld [vmem:[#allocation7 + $0x128] sm:$0xff]
    %v311 = vld [vmem:[#allocation7 + $0x130] sm:$0xff]
    %v312 = vld [vmem:[#allocation7 + $0x138] sm:$0xff]
    %v313 = vld [vmem:[#allocation7 + $0x140] sm:$0xff]
    %v314 = vld [vmem:[#allocation7 + $0x148] sm:$0xff]
    %v315 = vld [vmem:[#allocation7 + $0x150] sm:$0xff]
    %v316 = vld [vmem:[#allocation7 + $0x158] sm:$0xff]
    %v317 = vld [vmem:[#allocation7 + $0x160] sm:$0xff]
    %v318 = vld [vmem:[#allocation7 + $0x168] sm:$0xff]
    %v319 = vld [vmem:[#allocation7 + $0x170] sm:$0xff]
    %v320 = vld [vmem:[#allocation7 + $0x178] sm:$0xff]
    %v321 = vld [vmem:[%s3] sm:$0xf]
    %v323 = vlaneseq
    %v324 = vshrl.u32 %v323, 7
    %v325 = vsub.s32 0, %v324
    %v326 = vrot.slane %v321, %v325
    %v327 = vlaneseq
    %v328 = vshrl.u32 %v327, 7
    %v329 = vsub.s32 1, %v328
    %v330 = vrot.slane %v321, %v329
    %v331 = vlaneseq
    %v332 = vshrl.u32 %v331, 7
    %v333 = vsub.s32 2, %v332
    %v334 = vrot.slane %v321, %v333
    %v335 = vlaneseq
    %v336 = vshrl.u32 %v335, 7
    %v337 = vsub.s32 3, %v336
    %v338 = vrot.slane %v321, %v337
    %v391 = vunpack.c.l.b16 %v273
    %v392 = vunpack.c.h.b16 %v273
    %v393 = vunpack.c.l.b16 %v274
    %v394 = vunpack.c.h.b16 %v274
    %v395 = vunpack.c.l.b16 %v275
    %v396 = vunpack.c.h.b16 %v275
    %v397 = vunpack.c.l.b16 %v276
    %v398 = vunpack.c.h.b16 %v276
    %v399 = vunpack.c.l.b16 %v277
    %v400 = vunpack.c.h.b16 %v277
    %v401 = vunpack.c.l.b16 %v278
    %v402 = vunpack.c.h.b16 %v278
    %v403 = vunpack.c.l.b16 %v279
    %v404 = vunpack.c.h.b16 %v279
    %v405 = vunpack.c.l.b16 %v280
    %v406 = vunpack.c.h.b16 %v280
    %v407 = vunpack.c.l.b16 %v281
    %v408 = vunpack.c.h.b16 %v281
    %v409 = vunpack.c.l.b16 %v282
    %v410 = vunpack.c.h.b16 %v282
    %v411 = vunpack.c.l.b16 %v283
    %v412 = vunpack.c.h.b16 %v283
    %v413 = vunpack.c.l.b16 %v284
    %v414 = vunpack.c.h.b16 %v284
    %v415 = vunpack.c.l.b16 %v285
    %v416 = vunpack.c.h.b16 %v285
    %v417 = vunpack.c.l.b16 %v286
    %v418 = vunpack.c.h.b16 %v286
    %v419 = vunpack.c.l.b16 %v287
    %v420 = vunpack.c.h.b16 %v287
    %v421 = vunpack.c.l.b16 %v288
    %v422 = vunpack.c.h.b16 %v288
    %v423 = vunpack.c.l.b16 %v289
    %v424 = vunpack.c.h.b16 %v289
    %v425 = vunpack.c.l.b16 %v290
    %v426 = vunpack.c.h.b16 %v290
    %v427 = vunpack.c.l.b16 %v291
    %v428 = vunpack.c.h.b16 %v291
    %v429 = vunpack.c.l.b16 %v292
    %v430 = vunpack.c.h.b16 %v292
    %v431 = vunpack.c.l.b16 %v293
    %v432 = vunpack.c.h.b16 %v293
    %v433 = vunpack.c.l.b16 %v294
    %v434 = vunpack.c.h.b16 %v294
    %v435 = vunpack.c.l.b16 %v295
    %v436 = vunpack.c.h.b16 %v295
    %v437 = vunpack.c.l.b16 %v296
    %v438 = vunpack.c.h.b16 %v296
    %v439 = vunpack.c.l.b16 %v297
    %v440 = vunpack.c.h.b16 %v297
    %v441 = vunpack.c.l.b16 %v298
    %v442 = vunpack.c.h.b16 %v298
    %v443 = vunpack.c.l.b16 %v299
    %v444 = vunpack.c.h.b16 %v299
    %v445 = vunpack.c.l.b16 %v300
    %v446 = vunpack.c.h.b16 %v300
    %v447 = vunpack.c.l.b16 %v301
    %v448 = vunpack.c.h.b16 %v301
    %v449 = vunpack.c.l.b16 %v302
    %v450 = vunpack.c.h.b16 %v302
    %v451 = vunpack.c.l.b16 %v303
    %v452 = vunpack.c.h.b16 %v303
    %v453 = vunpack.c.l.b16 %v304
    %v454 = vunpack.c.h.b16 %v304
    %v455 = vunpack.c.l.b16 %v305
    %v456 = vunpack.c.h.b16 %v305
    %v457 = vunpack.c.l.b16 %v306
    %v458 = vunpack.c.h.b16 %v306
    %v459 = vunpack.c.l.b16 %v307
    %v460 = vunpack.c.h.b16 %v307
    %v461 = vunpack.c.l.b16 %v308
    %v462 = vunpack.c.h.b16 %v308
    %v463 = vunpack.c.l.b16 %v309
    %v464 = vunpack.c.h.b16 %v309
    %v465 = vunpack.c.l.b16 %v310
    %v466 = vunpack.c.h.b16 %v310
    %v467 = vunpack.c.l.b16 %v311
    %v468 = vunpack.c.h.b16 %v311
    %v469 = vunpack.c.l.b16 %v312
    %v470 = vunpack.c.h.b16 %v312
    %v471 = vunpack.c.l.b16 %v313
    %v472 = vunpack.c.h.b16 %v313
    %v473 = vunpack.c.l.b16 %v314
    %v474 = vunpack.c.h.b16 %v314
    %v475 = vunpack.c.l.b16 %v315
    %v476 = vunpack.c.h.b16 %v315
    %v477 = vunpack.c.l.b16 %v316
    %v478 = vunpack.c.h.b16 %v316
    %v479 = vunpack.c.l.b16 %v317
    %v480 = vunpack.c.h.b16 %v317
    %v481 = vunpack.c.l.b16 %v318
    %v482 = vunpack.c.h.b16 %v318
    %v483 = vunpack.c.l.b16 %v319
    %v484 = vunpack.c.h.b16 %v319
    %v485 = vunpack.c.l.b16 %v320
    %v486 = vunpack.c.h.b16 %v320
    %v487 = vpack.c.b16 %v395, %v391
    %v488 = vpack.c.b16 %v396, %v392
    %v489 = vpack.c.b16 %v397, %v393
    %v490 = vpack.c.b16 %v398, %v394
    %v491 = vpack.c.b16 %v403, %v399
    %v492 = vpack.c.b16 %v404, %v400
    %v493 = vpack.c.b16 %v405, %v401
    %v494 = vpack.c.b16 %v406, %v402
    %v495 = vpack.c.b16 %v411, %v407
    %v496 = vpack.c.b16 %v412, %v408
    %v497 = vpack.c.b16 %v413, %v409
    %v498 = vpack.c.b16 %v414, %v410
    %v499 = vpack.c.b16 %v419, %v415
    %v500 = vpack.c.b16 %v420, %v416
    %v501 = vpack.c.b16 %v421, %v417
    %v502 = vpack.c.b16 %v422, %v418
    %v503 = vpack.c.b16 %v427, %v423
    %v504 = vpack.c.b16 %v428, %v424
    %v505 = vpack.c.b16 %v429, %v425
    %v506 = vpack.c.b16 %v430, %v426
    %v507 = vpack.c.b16 %v435, %v431
    %v508 = vpack.c.b16 %v436, %v432
    %v509 = vpack.c.b16 %v437, %v433
    %v510 = vpack.c.b16 %v438, %v434
    %v511 = vpack.c.b16 %v443, %v439
    %v512 = vpack.c.b16 %v444, %v440
    %v513 = vpack.c.b16 %v445, %v441
    %v514 = vpack.c.b16 %v446, %v442
    %v515 = vpack.c.b16 %v451, %v447
    %v516 = vpack.c.b16 %v452, %v448
    %v517 = vpack.c.b16 %v453, %v449
    %v518 = vpack.c.b16 %v454, %v450
    %v519 = vpack.c.b16 %v459, %v455
    %v520 = vpack.c.b16 %v460, %v456
    %v521 = vpack.c.b16 %v461, %v457
    %v522 = vpack.c.b16 %v462, %v458
    %v523 = vpack.c.b16 %v467, %v463
    %v524 = vpack.c.b16 %v468, %v464
    %v525 = vpack.c.b16 %v469, %v465
    %v526 = vpack.c.b16 %v470, %v466
    %v527 = vpack.c.b16 %v475, %v471
    %v528 = vpack.c.b16 %v476, %v472
    %v529 = vpack.c.b16 %v477, %v473
    %v530 = vpack.c.b16 %v478, %v474
    %v531 = vpack.c.b16 %v483, %v479
    %v532 = vpack.c.b16 %v484, %v480
    %v533 = vpack.c.b16 %v485, %v481
    %v534 = vpack.c.b16 %v486, %v482
    %v584 = vsel %vm108, %v272, 0
    %586 = vmatprep.subr.bf16.mxu0 %v488
    %587 = vmatpush1.bf16.msra.mxu0 %v487
    %588 = vmatprep.subr.bf16.mxu0 %v492
    %589 = vmatpush1.bf16.msra.mxu0 %v491
    %590 = vmatprep.subr.bf16.mxu0 %v496
    %591 = vmatpush1.bf16.msra.mxu0 %v495
    %592 = vmatprep.subr.bf16.mxu0 %v500
    %593 = vmatpush1.bf16.msra.mxu0 %v499
    %594 = vmatprep.subr.bf16.mxu0 %v504
    %595 = vmatpush1.bf16.msra.mxu0 %v503
    %596 = vmatprep.subr.bf16.mxu0 %v508
    %597 = vmatpush1.bf16.msra.mxu0 %v507
    %598 = vmatprep.subr.bf16.mxu0 %v512
    %599 = vmatpush1.bf16.msra.mxu0 %v511
    %600 = vmatprep.subr.bf16.mxu0 %v516
    %601 = vmatpush1.bf16.msra.mxu0 %v515
    %602 = vmatprep.subr.bf16.mxu0 %v520
    %603 = vmatpush1.bf16.msra.mxu0 %v519
    %604 = vmatprep.subr.bf16.mxu0 %v524
    %605 = vmatpush1.bf16.msra.mxu0 %v523
    %606 = vmatprep.subr.bf16.mxu0 %v528
    %607 = vmatpush1.bf16.msra.mxu0 %v527
    %608 = vmatprep.subr.bf16.mxu0 %v532
    %609 = vmatpush1.bf16.msra.mxu0 %v531
    %610 = vmatprep.subr.bf16.mxu0 0
    %611 = vmatpush1.bf16.msra.mxu0 0
    %612 = vmatprep.subr.bf16.mxu0 0
    %613 = vmatpush1.bf16.msra.mxu0 0
    %614 = vmatprep.subr.bf16.mxu0 0
    %615 = vmatpush1.bf16.msra.mxu0 0
    %616 = vmatprep.subr.bf16.mxu0 0
    %617 = vmatpush1.bf16.msra.mxu0 0
    %618 = vmatprep.mubr.bf16.mxu0 %v584
    %619 = vmatmul.mubr.bf16.gmra.mrb[0].mxu0 %v271
    %v620 = vpop.f32.mrb[0].mxu0
    %v621 = vadd.f32 %v326, %v620
    %v622 = vpop.f32.mrb[0].mxu0
    %v623 = vadd.f32 %v330, %v622
    %v624 = vpop.f32.mrb[0].mxu0
    %v625 = vpop.f32.mrb[0].mxu0
    %626 = vdwg.mxu0
    %627 = vmatprep.subr.bf16.mxu0 %v490
    %628 = vmatpush1.bf16.msra.mxu0 %v489
    %629 = vmatprep.subr.bf16.mxu0 %v494
    %630 = vmatpush1.bf16.msra.mxu0 %v493
    %631 = vmatprep.subr.bf16.mxu0 %v498
    %632 = vmatpush1.bf16.msra.mxu0 %v497
    %633 = vmatprep.subr.bf16.mxu0 %v502
    %634 = vmatpush1.bf16.msra.mxu0 %v501
    %635 = vmatprep.subr.bf16.mxu0 %v506
    %636 = vmatpush1.bf16.msra.mxu0 %v505
    %637 = vmatprep.subr.bf16.mxu0 %v510
    %638 = vmatpush1.bf16.msra.mxu0 %v509
    %639 = vmatprep.subr.bf16.mxu0 %v514
    %640 = vmatpush1.bf16.msra.mxu0 %v513
    %641 = vmatprep.subr.bf16.mxu0 %v518
    %642 = vmatpush1.bf16.msra.mxu0 %v517
    %643 = vmatprep.subr.bf16.mxu0 %v522
    %644 = vmatpush1.bf16.msra.mxu0 %v521
    %645 = vmatprep.subr.bf16.mxu0 %v526
    %646 = vmatpush1.bf16.msra.mxu0 %v525
    %647 = vmatprep.subr.bf16.mxu0 %v530
    %648 = vmatpush1.bf16.msra.mxu0 %v529
    %649 = vmatprep.subr.bf16.mxu0 %v534
    %650 = vmatpush1.bf16.msra.mxu0 %v533
    %651 = vmatprep.subr.bf16.mxu0 0
    %652 = vmatpush1.bf16.msra.mxu0 0
    %653 = vmatprep.subr.bf16.mxu0 0
    %654 = vmatpush1.bf16.msra.mxu0 0
    %655 = vmatprep.subr.bf16.mxu0 0
    %656 = vmatpush1.bf16.msra.mxu0 0
    %657 = vmatprep.subr.bf16.mxu0 0
    %658 = vmatpush1.bf16.msra.mxu0 0
    %659 = vmatprep.mubr.bf16.mxu0 %v584
    %660 = vmatmul.mubr.bf16.gmra.mrb[0].mxu0 %v271
    %v661 = vpop.f32.mrb[0].mxu0
    %v662 = vadd.f32 %v334, %v661
    %v663 = vpop.f32.mrb[0].mxu0
    %v664 = vadd.f32 %v338, %v663
    %v665 = vpop.f32.mrb[0].mxu0
    %v666 = vpop.f32.mrb[0].mxu0
    %667 = vdwg.mxu0
    %668 = vst [vmem:[#allocation8] sm:$0xff] %v621
    %669 = vst [vmem:[#allocation8 + $0x8] sm:$0xff] %v623
    %670 = vst [vmem:[#allocation8 + $0x10] sm:$0xff] %v662
    %671 = vst [vmem:[#allocation8 + $0x18] sm:$0xff] %v664
    // Predicated region
    $region30: #{tpu_custom_call.1} parent=1 // pred_check
      _
    $region31: #{tpu_custom_call.1} parent=1 // pred_check_branch
      %673 = sbr.rel (0) target = $region33
    $region32: #{tpu_custom_call.1} parent=1 // pred_region
      %s675 = ssub.s32 512, 512
      %676 = vsyncadd [#allocation4], %s675
      %s678 = sshll.u32 [#allocation8], 4
      %s679 = int_to_ptr.vmem [resolvable:$true] %s678
      %681 = dma.vmem_to_hbm [thread:$0]  %s679, 512, %s4, [#allocation4]
    $region33: #{tpu_custom_call.1} parent=1 // pred_fallthru
      _
    // Predicated region
    $region34: #{tpu_custom_call.1} parent=1 // pred_check
      _
    $region35: #{tpu_custom_call.1} parent=1 // pred_check_branch
      %683 = sbr.rel (0) target = $region37
    $region36: #{tpu_custom_call.1} parent=1 // pred_region
      %684 = dma.done [#allocation4], 512
    $region37: #{tpu_custom_call.1} parent=1 // pred_fallthru
      _
    %685 = vsyncpa [#allocation3], 1
    %686 = vsyncpa [#allocation6], 1
    %687 = vsyncpa [#allocation4], 1

</llo_original>
